<compile_context>
chip_gen: v7x
topology: tpu7x:2x2x1
jax: 0.10.0
libtpu: 0.0.40
codegen_flags: <defaults>
</compile_context>

<pallas_src>
import jax
import jax.numpy as jnp
from jax import lax
from jax.experimental import pallas as pl
from jax.experimental.pallas import tpu as pltpu


# ---------------------------------------------------------------------------
# Kernels
# ---------------------------------------------------------------------------

def _log_softmax_rows(logits):
    """Numerically-stable log_softmax over the last (class) axis."""
    m = jnp.max(logits, axis=-1, keepdims=True)
    z = logits - m
    lse = jnp.log(jnp.sum(jnp.exp(z), axis=-1, keepdims=True))
    return z - lse


def fasttext_single_kernel(x_ref, w1_ref, b1_ref, w2_ref, b2_ref, out_ref):
    """Whole problem VMEM-resident; no grid, no pipelining."""
    # h = x @ W1.T + b1 — contract the last (vocab/lane) dims of both
    # operands so W1 is used as-is ([H, V]) with no transpose.
    h = lax.dot_general(
        x_ref[...], w1_ref[...],
        dimension_numbers=(((1,), (1,)), ((), ())),
        preferred_element_type=jnp.float32,
    ) + b1_ref[...]
    # logits = h @ W2.T + b2 (tiny second layer, kept in f32).
    logits = lax.dot_general(
        h, w2_ref[...],
        dimension_numbers=(((1,), (1,)), ((), ())),
        preferred_element_type=jnp.float32,
    ) + b2_ref[...]
    out_ref[...] = _log_softmax_rows(logits)


def fasttext_tiled_kernel(x_ref, w1_ref, b1_ref, w2_ref, b2_ref, out_ref,
                          acc_ref):
    """Tiled over (batch, vocab); vocab is the last ('arbitrary') reduction axis."""
    k = pl.program_id(1)

    @pl.when(k == 0)
    def _init():
        acc_ref[...] = jnp.zeros_like(acc_ref)

    # Partial hidden accumulation: acc += x_tile @ w1_tile.T
    #   x_tile: [tb, tv] bf16, w1_tile: [H, tv] bf16, acc: [tb, H] f32.
    acc_ref[...] += lax.dot_general(
        x_ref[...], w1_ref[...],
        dimension_numbers=(((1,), (1,)), ((), ())),
        preferred_element_type=jnp.float32,
    )

    @pl.when(k == pl.num_programs(1) - 1)
    def _finalize():
        h = acc_ref[...] + b1_ref[...]
        logits = lax.dot_general(
            h, w2_ref[...],
            dimension_numbers=(((1,), (1,)), ((), ())),
            preferred_element_type=jnp.float32,
        ) + b2_ref[...]
        out_ref[...] = _log_softmax_rows(logits)


# ---------------------------------------------------------------------------
# Wrapper
# ---------------------------------------------------------------------------

def fasttext_multihot_forward(x, w1, b1, w2, b2, *,
                              block_b=None, block_v=None,
                              vmem_limit_bytes=96 * 1024 * 1024):
    """FastTextMuitiHot forward: log_softmax((x @ W1.T + b1) @ W2.T + b2, dim=1).

    x: [B, V] multi-hot; w1: [H, V]; b1: [H]; w2: [C, H]; b2: [C].
    Returns [B, C] f32 log-probabilities.

    Default (block_v is None): single un-pipelined VMEM-resident call — right
    choice for small/medium vocab. For large vocab pass block_v (multiple of
    128; size it per chip VMEM) and optionally block_b to tile the batch
    ('parallel') and vocab ('arbitrary' reduction) axes.
    """
    B, V = x.shape
    H = w1.shape[0]
    C = w2.shape[0]

    # bf16 for the large, vocab-sized operands (0/1 inputs are exact in bf16;
    # MXU accumulates in f32). Biases and the tiny second layer stay in f32.
    x_bf = jnp.asarray(x, jnp.bfloat16)
    w1_bf = jnp.asarray(w1, jnp.bfloat16)
    b1r = jnp.asarray(b1, jnp.float32).reshape(1, H)
    w2f = jnp.asarray(w2, jnp.float32)
    b2r = jnp.asarray(b2, jnp.float32).reshape(1, C)

    out_shape = jax.ShapeDtypeStruct((B, C), jnp.float32)

    if block_v is None:
        # Single-shot path: whole arrays in VMEM, no grid / pipeline machinery.
        vmem = pltpu.MemorySpace.VMEM
        return pl.pallas_call(
            fasttext_single_kernel,
            out_shape=out_shape,
            in_specs=[pl.BlockSpec(memory_space=vmem)] * 5,
            out_specs=pl.BlockSpec(memory_space=vmem),
            compiler_params=pltpu.CompilerParams(
                vmem_limit_bytes=vmem_limit_bytes),
        )(x_bf, w1_bf, b1r, w2f, b2r)

    # Tiled path for large vocab.
    if block_b is None:
        block_b = min(B, 128)
    assert B % block_b == 0 and (block_b % 8 == 0 or block_b == B), \
        "block_b must divide B and be a multiple of 8 (or equal B)"
    assert V % block_v == 0 and block_v % 128 == 0, \
        "block_v must divide V and be a multiple of 128"

    grid = (B // block_b, V // block_v)
    return pl.pallas_call(
        fasttext_tiled_kernel,
        out_shape=out_shape,
        grid=grid,
        in_specs=[
            pl.BlockSpec((block_b, block_v), lambda i, k: (i, k)),  # x tile
            pl.BlockSpec((H, block_v), lambda i, k: (0, k)),        # w1 tile
            pl.BlockSpec((1, H), lambda i, k: (0, 0)),              # b1
            pl.BlockSpec((C, H), lambda i, k: (0, 0)),              # w2
            pl.BlockSpec((1, C), lambda i, k: (0, 0)),              # b2
        ],
        out_specs=pl.BlockSpec((block_b, C), lambda i, k: (i, 0)),
        scratch_shapes=[pltpu.VMEM((block_b, H), jnp.float32)],
        compiler_params=pltpu.CompilerParams(
            dimension_semantics=("parallel", "arbitrary"),
            vmem_limit_bytes=vmem_limit_bytes),
    )(x_bf, w1_bf, b1r, w2f, b2r)


# ---------------------------------------------------------------------------
# Deterministic init + self-check
# ---------------------------------------------------------------------------

def xavier_uniform(key, shape):
    # PyTorch xavier_uniform_ on Linear.weight of shape (out, in):
    # bound = gain * sqrt(6 / (fan_in + fan_out)), gain=1.
    fan_out, fan_in = shape
    bound = (6.0 / (fan_in + fan_out)) ** 0.5
    return jax.random.uniform(key, shape, jnp.float32, -bound, bound)


def _ref_forward(x, w1, b1, w2, b2):
    return jax.nn.log_softmax((x @ w1.T + b1) @ w2.T + b2, axis=1)


if __name__ == "__main__":
    key = jax.random.PRNGKey(0)
    k_x, k_w1, k_b1, k_w2, k_b2 = jax.random.split(key, 5)

    # Config: vocab_size=256, hidden_size=32, num_classes=8, batch=8.
    B, V, H, C = 8, 256, 32, 8

    # Multi-hot style input (0/1 indicator vectors over the vocab).
    x = (jax.random.uniform(k_x, (B, V)) < 0.1).astype(jnp.float32)

    # Deterministic parameter init mirroring init_linears().
    w1 = xavier_uniform(k_w1, (H, V))                         # linear.weight
    b1 = jax.random.uniform(k_b1, (H,), jnp.float32, 0., 1.)  # linear.bias ~ U(0,1)
    w2 = xavier_uniform(k_w2, (C, H))                         # fc.weight
    b2 = jax.random.uniform(k_b2, (C,), jnp.float32, 0., 1.)  # fc.bias ~ U(0,1)

    # --- single-shot (VMEM-resident) path ---
    out = jax.block_until_ready(fasttext_multihot_forward(x, w1, b1, w2, b2))
    # Reference uses the same bf16-rounded W1 the kernel consumes (x is exact
    # in bf16, MXU accumulates in f32), so this validates the kernel itself.
    w1_r = w1.astype(jnp.bfloat16).astype(jnp.float32)
    ref = _ref_forward(x, w1_r, b1, w2, b2)
    assert out.shape == (B, C)
    assert jnp.allclose(out, ref, atol=1e-4, rtol=1e-4), "single-path mismatch"

    # --- tiled path (larger vocab, batch-parallel + vocab-reduction grid) ---
    B2, V2 = 16, 2048
    k_x2, k_w12 = jax.random.split(k_x)
    x2 = (jax.random.uniform(k_x2, (B2, V2)) < 0.1).astype(jnp.float32)
    w1_2 = xavier_uniform(k_w12, (H, V2))
    out2 = jax.block_until_ready(
        fasttext_multihot_forward(x2, w1_2, b1, w2, b2,
                                  block_b=8, block_v=512))
    w1_2r = w1_2.astype(jnp.bfloat16).astype(jnp.float32)
    ref2 = _ref_forward(x2, w1_2r, b1, w2, b2)
    assert out2.shape == (B2, C)
    assert jnp.allclose(out2, ref2, atol=1e-4, rtol=1e-4), "tiled-path mismatch"

    print("KERNEL_OK")
</pallas_src>

<mosaic_0001>
module attributes {stable_mosaic.version = 11 : i64} {
  func.func @fasttext_single_kernel(%arg0: memref<8x256xbf16, #tpu.memory_space<vmem>>, %arg1: memref<32x256xbf16, #tpu.memory_space<vmem>>, %arg2: memref<1x32xf32, #tpu.memory_space<vmem>>, %arg3: memref<8x32xf32, #tpu.memory_space<vmem>>, %arg4: memref<1x8xf32, #tpu.memory_space<vmem>>, %arg5: memref<8x8xf32, #tpu.memory_space<vmem>>) attributes {dimension_semantics = [], scalar_prefetch = 0 : i64, scratch_operands = 0 : i64, tpu.core_type = #tpu.core_type<tc>} {
    %c0 = arith.constant 0 : index
    %c0_0 = arith.constant 0 : index
    %0 = vector.load %arg0[%c0, %c0_0] : memref<8x256xbf16, #tpu.memory_space<vmem>>, vector<8x256xbf16>
    %c0_1 = arith.constant 0 : index
    %c0_2 = arith.constant 0 : index
    %1 = vector.load %arg1[%c0_1, %c0_2] : memref<32x256xbf16, #tpu.memory_space<vmem>>, vector<32x256xbf16>
    %cst = arith.constant dense<0.000000e+00> : vector<8x32xf32>
    %2 = tpu.matmul %0, %1, %cst {dimension_numbers = #tpu.dot_dimension_numbers<[1], [1], [0], [0], [0, 0, 1, 0], [], []>} : vector<8x256xbf16>, vector<32x256xbf16>, vector<8x32xf32> -> vector<8x32xf32>
    %c0_3 = arith.constant 0 : index
    %c0_4 = arith.constant 0 : index
    %3 = vector.load %arg2[%c0_3, %c0_4] : memref<1x32xf32, #tpu.memory_space<vmem>>, vector<1x32xf32>
    %4 = vector.broadcast %3 : vector<1x32xf32> to vector<8x32xf32>
    %5 = arith.addf %2, %4 : vector<8x32xf32>
    %c0_5 = arith.constant 0 : index
    %c0_6 = arith.constant 0 : index
    %6 = vector.load %arg3[%c0_5, %c0_6] : memref<8x32xf32, #tpu.memory_space<vmem>>, vector<8x32xf32>
    %cst_7 = arith.constant dense<0.000000e+00> : vector<8x8xf32>
    %7 = tpu.matmul %5, %6, %cst_7 {dimension_numbers = #tpu.dot_dimension_numbers<[1], [1], [0], [0], [0, 0, 1, 0], [], []>} : vector<8x32xf32>, vector<8x32xf32>, vector<8x8xf32> -> vector<8x8xf32>
    %c0_8 = arith.constant 0 : index
    %c0_9 = arith.constant 0 : index
    %8 = vector.load %arg4[%c0_8, %c0_9] : memref<1x8xf32, #tpu.memory_space<vmem>>, vector<1x8xf32>
    %9 = vector.broadcast %8 : vector<1x8xf32> to vector<8x8xf32>
    %10 = arith.addf %7, %9 : vector<8x8xf32>
    %cst_10 = arith.constant dense<0xFF800000> : vector<8xf32>
    %11 = vector.multi_reduction <maximumf>, %10, %cst_10 [1] : vector<8x8xf32> to vector<8xf32>
    %12 = vector.shape_cast %11 : vector<8xf32> to vector<8x1xf32>
    %13 = vector.broadcast %12 : vector<8x1xf32> to vector<8x8xf32>
    %14 = arith.subf %10, %13 : vector<8x8xf32>
    %15 = math.exp %14 : vector<8x8xf32>
    %cst_11 = arith.constant dense<0.000000e+00> : vector<8xf32>
    %16 = vector.multi_reduction <add>, %15, %cst_11 [1] : vector<8x8xf32> to vector<8xf32>
    %17 = vector.shape_cast %16 : vector<8xf32> to vector<8x1xf32>
    %18 = math.log %17 : vector<8x1xf32>
    %19 = vector.broadcast %18 : vector<8x1xf32> to vector<8x8xf32>
    %20 = arith.subf %14, %19 : vector<8x8xf32>
    %c0_12 = arith.constant 0 : index
    %c0_13 = arith.constant 0 : index
    %21 = vector.load %arg5[%c0_12, %c0_13] : memref<8x8xf32, #tpu.memory_space<vmem>>, vector<8x8xf32>
    tpu.vector_store %arg5[%c0_12, %c0_13], %20 {strides = array<i32>} : memref<8x8xf32, #tpu.memory_space<vmem>>, vector<8x8xf32>,
    return
  }
}

</mosaic_0001>

<llo_original>
// kernel: tpu_custom_call.1
$region0: #{tpu_custom_call.1}
  #allocation0 [shape = 'u32[]', space=smem, size = 0x4, offset = 0x4, fixed_abs, tag = 'smem constant byte address 0x4 - core index']
  #allocation1 [shape = 'u32[144,128]{1,0:T(1,128)}', space=vmem, size = 0x12000, scoped, tag = 'internal scratch']
  %s0 = inlined_call_operand.hbm [shape: bf16[8,256], index: 0, kind: input, shape index: {}]
  %s1 = inlined_call_operand.hbm [shape: bf16[32,256], index: 1, kind: input, shape index: {}]
  %s2 = inlined_call_operand.hbm [shape: f32[1,32], index: 2, kind: input, shape index: {}]
  %s3 = inlined_call_operand.hbm [shape: f32[8,32], index: 3, kind: input, shape index: {}]
  %s4 = inlined_call_operand.hbm [shape: f32[1,8], index: 4, kind: input, shape index: {}]
  %s5 = inlined_call_operand.hbm [shape: f32[8,8], index: 5, kind: output, shape index: {}]
  %s6 = sld [smem:[#allocation0]]
  $region50: #{tpu_custom_call.1} parent=0
    _
  %s8 = ssub.s32 1, %s6
  %s9 = scalar_select 0, %s8, %s6
  $region1: #{tpu_custom_call.1} parent=0
    #allocation2 [shape = 'u8[4096]{0}', space=vmem, size = 0x1000, scoped, tag = 'input window, operand 0, single buffered']
    #allocation3 [shape = 's32[1]{0}', space=sflag, size = 0x4, scoped, tag = 'scoped memory for tpu_custom_call.1']
    #allocation4 [shape = 's32[1]{0}', space=sflag, size = 0x4, scoped, tag = 'scoped memory for tpu_custom_call.1']
    #allocation5 [shape = 'u8[16384]{0}', space=vmem, size = 0x4000, scoped, tag = 'input window, operand 1, single buffered']
    #allocation6 [shape = 's32[1]{0}', space=sflag, size = 0x4, scoped, tag = 'scoped memory for tpu_custom_call.1']
    #allocation7 [shape = 'u8[512]{0}', space=vmem, size = 0x400, scoped, tag = 'input window, operand 2, single buffered']
    #allocation8 [shape = 'u8[4096]{0}', space=vmem, size = 0x1000, scoped, tag = 'input window, operand 3, single buffered']
    #allocation9 [shape = 's32[1]{0}', space=sflag, size = 0x4, scoped, tag = 'scoped memory for tpu_custom_call.1']
    #allocation10 [shape = 'u8[512]{0}', space=vmem, size = 0x400, scoped, tag = 'input window, operand 4, single buffered']
    #allocation11 [shape = 'u8[4096]{0}', space=vmem, size = 0x1000, scoped, tag = 'output window, operand 0, single buffered']
    %10 = vsyncpa [#allocation3], 0
    %11 = vsyncpa [#allocation6], 0
    %12 = vsyncpa [#allocation9], 0
    %13 = vsyncpa [#allocation4], 0
    // Predicated region
    $region2: #{tpu_custom_call.1} parent=1 // pred_check
      _
    $region3: #{tpu_custom_call.1} parent=1 // pred_check_branch
      %15 = sbr.rel (0) target = $region5
    $region4: #{tpu_custom_call.1} parent=1 // pred_region
      %s17 = ssub.s32 128, 128
      %18 = vsyncadd [#allocation3], %s17
      %s20 = sshll.u32 [#allocation2], 4
      %s21 = int_to_ptr.vmem [resolvable:$true] %s20
      %23 = dma.hbm_to_vmem [thread:$0]  %s0, 128, %s21, [#allocation3]
    $region5: #{tpu_custom_call.1} parent=1 // pred_fallthru
      _
    // Predicated region
    $region6: #{tpu_custom_call.1} parent=1 // pred_check
      _
    $region7: #{tpu_custom_call.1} parent=1 // pred_check_branch
      %25 = sbr.rel (0) target = $region9
    $region8: #{tpu_custom_call.1} parent=1 // pred_region
      %s27 = ssub.s32 512, 512
      %28 = vsyncadd [#allocation6], %s27
      %s29 = sshll.u32 [#allocation5], 4
      %s30 = int_to_ptr.vmem [resolvable:$true] %s29
      %35 = dma.hbm_to_vmem [thread:$0]  %s1, 512, %s30, [#allocation6], 128, 128, 8
    $region9: #{tpu_custom_call.1} parent=1 // pred_fallthru
      _
    // Predicated region
    $region10: #{tpu_custom_call.1} parent=1 // pred_check
      _
    $region11: #{tpu_custom_call.1} parent=1 // pred_check_branch
      %37 = sbr.rel (0) target = $region13
    $region12: #{tpu_custom_call.1} parent=1 // pred_region
      %s39 = ssub.s32 16, 16
      %40 = vsyncadd [#allocation6], %s39
      %s42 = sshll.u32 [#allocation7], 4
      %s43 = int_to_ptr.vmem [resolvable:$true] %s42
      %45 = dma.hbm_to_vmem [thread:$0]  %s2, 16, %s43, [#allocation6]
    $region13: #{tpu_custom_call.1} parent=1 // pred_fallthru
      _
    // Predicated region
    $region14: #{tpu_custom_call.1} parent=1 // pred_check
      _
    $region15: #{tpu_custom_call.1} parent=1 // pred_check_branch
      %47 = sbr.rel (0) target = $region17
    $region16: #{tpu_custom_call.1} parent=1 // pred_region
      %s49 = ssub.s32 128, 128
      %50 = vsyncadd [#allocation9], %s49
      %s52 = sshll.u32 [#allocation8], 4
      %s53 = int_to_ptr.vmem [resolvable:$true] %s52
      %55 = dma.hbm_to_vmem [thread:$0]  %s3, 128, %s53, [#allocation9]
    $region17: #{tpu_custom_call.1} parent=1 // pred_fallthru
      _
    // Predicated region
    $region18: #{tpu_custom_call.1} parent=1 // pred_check
      _
    $region19: #{tpu_custom_call.1} parent=1 // pred_check_branch
      %57 = sbr.rel (0) target = $region21
    $region20: #{tpu_custom_call.1} parent=1 // pred_region
      %s59 = ssub.s32 16, 16
      %60 = vsyncadd [#allocation9], %s59
      %s62 = sshll.u32 [#allocation10], 4
      %s63 = int_to_ptr.vmem [resolvable:$true] %s62
      %65 = dma.hbm_to_vmem [thread:$0]  %s4, 16, %s63, [#allocation9]
    $region21: #{tpu_custom_call.1} parent=1 // pred_fallthru
      _
    // Predicated region
    $region22: #{tpu_custom_call.1} parent=1 // pred_check
      _
    $region23: #{tpu_custom_call.1} parent=1 // pred_check_branch
      %67 = sbr.rel (0) target = $region25
    $region24: #{tpu_custom_call.1} parent=1 // pred_region
      %68 = dma.done [#allocation3], 128
    $region25: #{tpu_custom_call.1} parent=1 // pred_fallthru
      _
    // Predicated region
    $region26: #{tpu_custom_call.1} parent=1 // pred_check
      _
    $region27: #{tpu_custom_call.1} parent=1 // pred_check_branch
      %70 = sbr.rel (0) target = $region29
    $region28: #{tpu_custom_call.1} parent=1 // pred_region
      %71 = dma.done [#allocation6], 512
    $region29: #{tpu_custom_call.1} parent=1 // pred_fallthru
      _
    // Predicated region
    $region30: #{tpu_custom_call.1} parent=1 // pred_check
      _
    $region31: #{tpu_custom_call.1} parent=1 // pred_check_branch
      %73 = sbr.rel (0) target = $region33
    $region32: #{tpu_custom_call.1} parent=1 // pred_region
      %74 = dma.done [#allocation6], 16
    $region33: #{tpu_custom_call.1} parent=1 // pred_fallthru
      _
    // Predicated region
    $region34: #{tpu_custom_call.1} parent=1 // pred_check
      _
    $region35: #{tpu_custom_call.1} parent=1 // pred_check_branch
      %76 = sbr.rel (0) target = $region37
    $region36: #{tpu_custom_call.1} parent=1 // pred_region
      %77 = dma.done [#allocation9], 128
    $region37: #{tpu_custom_call.1} parent=1 // pred_fallthru
      _
    // Predicated region
    $region38: #{tpu_custom_call.1} parent=1 // pred_check
      _
    $region39: #{tpu_custom_call.1} parent=1 // pred_check_branch
      %79 = sbr.rel (0) target = $region41
    $region40: #{tpu_custom_call.1} parent=1 // pred_region
      %80 = dma.done [#allocation9], 16
    $region41: #{tpu_custom_call.1} parent=1 // pred_fallthru
      _
    %v82 = vld [vmem:[#allocation2] sm:$0xff]
    %v83 = vld [vmem:[#allocation5] sm:$0xff]
    %v84 = vld [vmem:[#allocation5 + $0x8] sm:$0xff]
    %v85 = vld [vmem:[#allocation5 + $0x10] sm:$0xff]
    %v86 = vld [vmem:[#allocation5 + $0x18] sm:$0xff]
    %v87 = vld [vmem:[#allocation7] sm:$0x1]
    %v89 = vlaneseq
    %v90 = vshrl.u32 %v89, 7
    %v91 = vsub.s32 0, %v90
    %v92 = vrot.slane %v87, %v91
    %v95 = vunpack.c.l.b16 %v82
    %v96 = vunpack.c.h.b16 %v82
    %v97 = vpack.c.b16 %v95, %v95
    %v98 = vpack.c.b16 %v96, %v96
    %v105 = vunpack.c.l.b16 %v83
    %v106 = vunpack.c.h.b16 %v83
    %v107 = vunpack.c.l.b16 %v84
    %v108 = vunpack.c.h.b16 %v84
    %v109 = vunpack.c.l.b16 %v85
    %v110 = vunpack.c.h.b16 %v85
    %v111 = vunpack.c.l.b16 %v86
    %v112 = vunpack.c.h.b16 %v86
    %v113 = vpack.c.b16 %v107, %v105
    %v114 = vpack.c.b16 %v108, %v106
    %v115 = vpack.c.b16 %v111, %v109
    %v116 = vpack.c.b16 %v112, %v110
    %121 = vmatprep.subr.bf16.mxu0 %v114
    %122 = vmatpush1.bf16.xpose.msra.mxu0 %v113
    %123 = vmatprep.subr.bf16.mxu0 %v116
    %124 = vmatpush1.bf16.xpose.msra.mxu0 %v115
    %125 = vmatprep.subr.bf16.mxu0 0
    %126 = vmatpush1.bf16.xpose.msra.mxu0 0
    %127 = vmatprep.subr.bf16.mxu0 0
    %128 = vmatpush1.bf16.xpose.msra.mxu0 0
    %129 = vmatprep.subr.bf16.mxu0 0
    %130 = vmatpush1.bf16.xpose.msra.mxu0 0
    %131 = vmatprep.subr.bf16.mxu0 0
    %132 = vmatpush1.bf16.xpose.msra.mxu0 0
    %133 = vmatprep.subr.bf16.mxu0 0
    %134 = vmatpush1.bf16.xpose.msra.mxu0 0
    %135 = vmatprep.subr.bf16.mxu0 0
    %136 = vmatpush1.bf16.xpose.msra.mxu0 0
    %137 = vmatprep.subr.bf16.mxu0 0
    %138 = vmatpush1.bf16.xpose.msra.mxu0 0
    %139 = vmatprep.subr.bf16.mxu0 0
    %140 = vmatpush1.bf16.xpose.msra.mxu0 0
    %141 = vmatprep.subr.bf16.mxu0 0
    %142 = vmatpush1.bf16.xpose.msra.mxu0 0
    %143 = vmatprep.subr.bf16.mxu0 0
    %144 = vmatpush1.bf16.xpose.msra.mxu0 0
    %145 = vmatprep.subr.bf16.mxu0 0
    %146 = vmatpush1.bf16.xpose.msra.mxu0 0
    %147 = vmatprep.subr.bf16.mxu0 0
    %148 = vmatpush1.bf16.xpose.msra.mxu0 0
    %149 = vmatprep.subr.bf16.mxu0 0
    %150 = vmatpush1.bf16.xpose.msra.mxu0 0
    %151 = vmatprep.subr.bf16.mxu0 0
    %152 = vmatpush1.bf16.xpose.msra.mxu0 0
    %153 = vmatprep.mubr.bf16.mxu0 %v98
    %154 = vmatmul.mubr.bf16.gmra.mrb[0].mxu0 %v97
    %v155 = vpop.f32.mrb[0].mxu0
    %v156 = vadd.f32 %v92, %v155
    %v157 = vpop.f32.mrb[0].mxu0
    %v158 = vpop.f32.mrb[0].mxu0
    %v159 = vpop.f32.mrb[0].mxu0
    %160 = vdwg.mxu0
    %v161 = vld [vmem:[#allocation8] sm:$0xff]
    %v162 = vld [vmem:[#allocation10] sm:$0x1]
    %v164 = vlaneseq
    %v165 = vshrl.u32 %v164, 7
    %v166 = vsub.s32 0, %v165
    %v167 = vrot.slane %v162, %v166
    %vm169 = vcmask 261120
    %v171 = vsel %vm169, %v156, 0
    %v174 = vsel %vm169, %v161, 0
    %176 = vmatprep.subr.mxu0 0.0
    %177 = vmatpush1.xpose.msra.mxu0 %v174
    %178 = vmatprep.subr.mxu0 0.0
    %179 = vmatpush1.xpose.msra.mxu0 0.0
    %180 = vmatprep.subr.mxu0 0.0
    %181 = vmatpush1.xpose.msra.mxu0 0.0
    %182 = vmatprep.subr.mxu0 0.0
    %183 = vmatpush1.xpose.msra.mxu0 0.0
    %184 = vmatprep.subr.mxu0 0.0
    %185 = vmatpush1.xpose.msra.mxu0 0.0
    %186 = vmatprep.subr.mxu0 0.0
    %187 = vmatpush1.xpose.msra.mxu0 0.0
    %188 = vmatprep.subr.mxu0 0.0
    %189 = vmatpush1.xpose.msra.mxu0 0.0
    %190 = vmatprep.subr.mxu0 0.0
    %191 = vmatpush1.xpose.msra.mxu0 0.0
    %192 = vmatprep.subr.mxu0 0.0
    %193 = vmatpush1.xpose.msra.mxu0 0.0
    %194 = vmatprep.subr.mxu0 0.0
    %195 = vmatpush1.xpose.msra.mxu0 0.0
    %196 = vmatprep.subr.mxu0 0.0
    %197 = vmatpush1.xpose.msra.mxu0 0.0
    %198 = vmatprep.subr.mxu0 0.0
    %199 = vmatpush1.xpose.msra.mxu0 0.0
    %200 = vmatprep.subr.mxu0 0.0
    %201 = vmatpush1.xpose.msra.mxu0 0.0
    %202 = vmatprep.subr.mxu0 0.0
    %203 = vmatpush1.xpose.msra.mxu0 0.0
    %204 = vmatprep.subr.mxu0 0.0
    %205 = vmatpush1.xpose.msra.mxu0 0.0
    %206 = vmatprep.subr.mxu0 0.0
    %207 = vmatpush1.xpose.msra.mxu0 0.0
    %208 = vmatprep.subr.mxu0 0.0
    %209 = vmatpush1.xpose.msra.mxu0 0.0
    %210 = vmatprep.subr.mxu0 0.0
    %211 = vmatpush1.xpose.msra.mxu0 0.0
    %212 = vmatprep.subr.mxu0 0.0
    %213 = vmatpush1.xpose.msra.mxu0 0.0
    %214 = vmatprep.subr.mxu0 0.0
    %215 = vmatpush1.xpose.msra.mxu0 0.0
    %216 = vmatprep.subr.mxu0 0.0
    %217 = vmatpush1.xpose.msra.mxu0 0.0
    %218 = vmatprep.subr.mxu0 0.0
    %219 = vmatpush1.xpose.msra.mxu0 0.0
    %220 = vmatprep.subr.mxu0 0.0
    %221 = vmatpush1.xpose.msra.mxu0 0.0
    %222 = vmatprep.subr.mxu0 0.0
    %223 = vmatpush1.xpose.msra.mxu0 0.0
    %224 = vmatprep.subr.mxu0 0.0
    %225 = vmatpush1.xpose.msra.mxu0 0.0
    %226 = vmatprep.subr.mxu0 0.0
    %227 = vmatpush1.xpose.msra.mxu0 0.0
    %228 = vmatprep.subr.mxu0 0.0
    %229 = vmatpush1.xpose.msra.mxu0 0.0
    %230 = vmatprep.subr.mxu0 0.0
    %231 = vmatpush1.xpose.msra.mxu0 0.0
    %232 = vmatprep.subr.mxu0 0.0
    %233 = vmatpush1.xpose.msra.mxu0 0.0
    %234 = vmatprep.subr.mxu0 0.0
    %235 = vmatpush1.xpose.msra.mxu0 0.0
    %236 = vmatprep.subr.mxu0 0.0
    %237 = vmatpush1.xpose.msra.mxu0 0.0
    %238 = vmatprep.subr.mxu0 0.0
    %239 = vmatpush1.xpose.msra.mxu0 0.0
    %240 = vmatprep.mubr.f32.mxu0 0.0
    %241 = vmatmul.mubr.f32.gmra.mrb[0].mxu0 %v171
    %v242 = vpop.f32.mrb[0].mxu0
    %v243 = vadd.f32 %v167, %v242
    %v244 = vpop.f32.mrb[0].mxu0
    %245 = vdwg.mxu0
    %vm246 = vcmask 64512
    %v247 = vsel %vm246, %v243, -inf
    %248 = vmax.xlane.f32.xlu0 %v247
    %v249 = vpop.xlane.xlu0 %248
    %v250 = vsub.f32 %v243, %v249
    %v251 = vmul.f32 %v250, 1.442695
    %v252 = vpow.pop %v251
    %v253 = vsel %vm246, %v252, 0.0
    %254 = vadd.xlane.f32.xlu0 %v253
    %v255 = vpop.xlane.xlu0 %254
    %v256 = vlog2.pop %v255
    %v257 = vmul.f32 %v256, 0.6931472
    %v258 = vsub.f32 %v250, %v257
    %259 = vst.msk [vmem:[#allocation11] sm:$0xff] %vm246, %v258
    // Predicated region
    $region42: #{tpu_custom_call.1} parent=1 // pred_check
      _
    $region43: #{tpu_custom_call.1} parent=1 // pred_check_branch
      %261 = sbr.rel (0) target = $region45
    $region44: #{tpu_custom_call.1} parent=1 // pred_region
      %s263 = ssub.s32 128, 128
      %264 = vsyncadd [#allocation4], %s263
      %s266 = sshll.u32 [#allocation11], 4
      %s267 = int_to_ptr.vmem [resolvable:$true] %s266
      %269 = dma.vmem_to_hbm [thread:$0]  %s267, 128, %s5, [#allocation4]
    $region45: #{tpu_custom_call.1} parent=1 // pred_fallthru
      _
    // Predicated region
    $region46: #{tpu_custom_call.1} parent=1 // pred_check
      _
    $region47: #{tpu_custom_call.1} parent=1 // pred_check_branch
      %271 = sbr.rel (0) target = $region49
    $region48: #{tpu_custom_call.1} parent=1 // pred_region
      %272 = dma.done [#allocation4], 128
    $region49: #{tpu_custom_call.1} parent=1 // pred_fallthru
      _
    %273 = vsyncpa [#allocation3], 1
    %274 = vsyncpa [#allocation6], 1
    %275 = vsyncpa [#allocation9], 1
    %276 = vsyncpa [#allocation4], 1

</llo_original>
